<compile_context>
chip_gen: v7x
topology: tpu7x:2x2x1
jax: 0.10.0
libtpu: 0.0.40
codegen_flags: <defaults>
</compile_context>

<pallas_src>
import functools

import jax
import jax.numpy as jnp
from jax.experimental import pallas as pl
from jax.experimental.pallas import tpu as pltpu


def _round_up(v, m):
    return ((v + m - 1) // m) * m


def _pool_att_kernel(x_ref, nwins_ref, w1_ref, b1_ref, w2_ref, b2_ref, o_ref,
                     m_sc, l_sc, acc_sc, *, block_m):
    # Per grid step:
    #   x_ref:     (Bt, Mt, D)  input dtype       nwins_ref: (Bt, 1) int32
    #   w1_ref:    (1, D)  input dtype            b1_ref:    (1, 1)  f32
    #   w2_ref:    (D, O)  input dtype            b2_ref:    (1, O)  f32
    #   o_ref:     (Bt, O)
    # VMEM scratch persisting across the M grid axis:
    #   m_sc, l_sc: (Bt, 1) f32   acc_sc: (Bt, D) f32
    j = pl.program_id(1)

    @pl.when(j == 0)
    def _init():
        m_sc[...] = jnp.full(m_sc.shape, -jnp.inf, dtype=m_sc.dtype)
        l_sc[...] = jnp.zeros(l_sc.shape, dtype=l_sc.dtype)
        acc_sc[...] = jnp.zeros(acc_sc.shape, dtype=acc_sc.dtype)

    x = x_ref[...]                                     # (Bt, Mt, D) input dtype
    w1 = w1_ref[...]                                   # (1, D)      input dtype

    # linear1: reduce over D (lanes) with keepdims so M stays on sublanes.
    # Multiplies stay in the input dtype, accumulation is f32.
    logits = jnp.sum(x * w1[None, :, :], axis=-1, keepdims=True,
                     dtype=jnp.float32)                # (Bt, Mt, 1)
    logits = logits + b1_ref[...].astype(jnp.float32)

    # Length mask on the *global* time index (matches the torch masking).
    # NOTE: rows with n_wins == 0 yield NaN, exactly like the PyTorch module.
    m_idx = jax.lax.broadcasted_iota(jnp.int32, logits.shape, 1) + j * block_m
    valid = m_idx < nwins_ref[...][:, :, None]         # (Bt, Mt, 1)
    logits = jnp.where(valid, logits, -jnp.inf)

    # Online softmax over the M grid axis (exact when the axis has one step).
    m_prev = m_sc[...][:, :, None]                     # (Bt, 1, 1)
    m_new = jnp.maximum(m_prev, jnp.max(logits, axis=1, keepdims=True))
    alpha = jnp.exp(m_prev - m_new)                    # (Bt, 1, 1)
    p = jnp.exp(logits - m_new)                        # (Bt, Mt, 1) f32
    alpha2 = alpha[:, :, 0]                            # (Bt, 1)
    l_sc[...] = alpha2 * l_sc[...] + jnp.sum(p, axis=1)          # (Bt, 1)

    # Pooling contribution: lane-broadcast of p against x (no relayout);
    # multiply in the input dtype, accumulate over M (sublanes) in f32.
    contrib = jnp.sum(p.astype(x.dtype) * x, axis=1, dtype=jnp.float32)
    acc_sc[...] = alpha2 * acc_sc[...] + contrib       # (Bt, D)
    m_sc[...] = m_new[:, :, 0]

    @pl.when(j == pl.num_programs(1) - 1)
    def _finalize():
        pooled = acc_sc[...] / l_sc[...]               # (Bt, D) f32
        # linear2 on the MXU: operands in the input dtype, f32 accumulation.
        out = jnp.dot(pooled.astype(w2_ref.dtype), w2_ref[...],
                      preferred_element_type=jnp.float32)
        out = out + b2_ref[...].astype(jnp.float32)    # (Bt, O)
        o_ref[...] = out.astype(o_ref.dtype)


def _tpu_generation_params():
    """(x-slab VMEM budget, vmem_limit_bytes, force >=2 batch grid steps)."""
    try:
        kind = jax.devices()[0].device_kind.lower()
    except Exception:  # pragma: no cover - defensive
        kind = ""
    if "v7" in kind:
        # 64 MiB VMEM per TC, 2 TCs/chip: conservative budget + 2-step split.
        return {"x_budget": 20 << 20, "vmem_limit": 32 << 20, "two_steps": True}
    if "v5 lite" in kind or "v5e" in kind or "v5lite" in kind:
        # 128 MiB VMEM, single TC, lowest HBM BW: big slabs, no forced split.
        return {"x_budget": 24 << 20, "vmem_limit": 64 << 20, "two_steps": False}
    if "v6" in kind:
        return {"x_budget": 28 << 20, "vmem_limit": 64 << 20, "two_steps": False}
    # Unknown chip: v7x-safe defaults.
    return {"x_budget": 20 << 20, "vmem_limit": 32 << 20, "two_steps": True}


def _choose_blocks(B, M, D, x_dtype, params):
    """Pick (batch block, M block) against lane/sublane-padded VMEM usage."""
    itemsize = jnp.dtype(x_dtype).itemsize
    sub = {4: 8, 2: 16, 1: 32}.get(itemsize, 8)        # sublane tile for dtype
    d_pad = _round_up(D, 128)                          # lane padding
    budget = params["x_budget"]

    def bytes_per_batch_row(mt):
        mt_pad = _round_up(mt, sub)
        # double-buffered x DMA + live x + product + one f32 reduce temporary
        slab = mt_pad * d_pad * (3 * itemsize + 4)
        # (Bt, Mt, 1) f32 temporaries (logits / p / mask) use 1 lane per vreg
        sparse = mt_pad * 512 * 3
        return slab + sparse + 8 * d_pad               # + acc/pooled rows

    bt_cap = budget // max(bytes_per_batch_row(M), 1)
    if bt_cap >= min(B, 8):
        mt = M                                         # whole sequence resident
        bt = int(min(B, bt_cap, 1024))
    else:
        # Long sequence: tile M (online softmax) at the minimum batch block.
        bt = min(B, 8)
        per_row = budget // max(bt, 1)
        mt = int(per_row // (d_pad * (3 * itemsize + 4) + 512 * 3))
        mt = max(sub, (mt // sub) * sub)
        if mt >= M:
            mt = M

    if B > 8:
        bt = max(8, (bt // 8) * 8)
        if params["two_steps"]:
            # Keep >= 2 batch grid steps so both v7x TensorCores get work.
            half = _round_up(-(-B // 2), 8)
            bt = max(8, min(bt, half))
    else:
        bt = B
    return bt, mt


def pool_att_forward(x, n_wins, w1, b1, w2, b2, *, block_b=None, block_m=None):
    """Fused Pallas equivalent of PoolAtt.forward(x, n_wins).

    Args:
      x:      (B, M, D) features.
      n_wins: (B,) valid window counts.
      w1:     (1, D) linear1 weight (torch layout), b1: (1,) bias.
      w2:     (O, D) linear2 weight (torch layout), b2: (O,) bias.
    Returns:
      (B, O) output, dtype of x.
    """
    B, M, D = x.shape
    O = w2.shape[0]
    assert w1.shape == (1, D) and b1.shape == (1,)
    assert w2.shape == (O, D) and b2.shape == (O,)
    assert n_wins.shape == (B,)

    params = _tpu_generation_params()
    bt, mt = _choose_blocks(B, M, D, x.dtype, params)
    if block_b is not None:
        bt = block_b
    if block_m is not None:
        mt = block_m

    b_pad = pl.cdiv(B, bt) * bt
    m_pad = _round_up(M, mt)
    grid = (b_pad // bt, m_pad // mt)

    n_wins = n_wins.astype(jnp.int32)
    if b_pad != B or m_pad != M:
        # Padded time steps (index >= M >= n_wins) are masked to -inf anyway.
        x = jnp.pad(x, ((0, b_pad - B), (0, m_pad - M), (0, 0)))
    if b_pad != B:
        # Padded rows get n_wins=1 so their softmax stays finite (sliced off).
        n_wins = jnp.pad(n_wins, (0, b_pad - B), constant_values=1)

    nwins2d = n_wins.reshape(b_pad, 1)
    w1_2d = w1.astype(x.dtype)                          # (1, D)
    b1_2d = b1.reshape(1, 1).astype(jnp.float32)        # (1, 1)
    w2_t = jnp.transpose(w2).astype(x.dtype)            # (D, O)
    b2_2d = b2.reshape(1, O).astype(jnp.float32)        # (1, O)

    itemsize = jnp.dtype(x.dtype).itemsize
    cost = pl.CostEstimate(
        flops=(2 * b_pad * m_pad * D          # linear1
               + 2 * b_pad * m_pad * D        # pooling
               + 2 * b_pad * D * O            # linear2
               + 8 * b_pad * m_pad),          # mask + softmax arithmetic
        transcendentals=2 * b_pad * m_pad,    # exp
        bytes_accessed=(itemsize * (b_pad * m_pad * D + b_pad * O + D + D * O)
                        + 4 * (b_pad + 1 + O)),
    )

    kernel = functools.partial(_pool_att_kernel, block_m=mt)

    out = pl.pallas_call(
        kernel,
        out_shape=jax.ShapeDtypeStruct((b_pad, O), x.dtype),
        grid_spec=pltpu.PrefetchScalarGridSpec(
            num_scalar_prefetch=0,
            grid=grid,
            in_specs=[
                pl.BlockSpec((bt, mt, D), lambda i, j: (i, j, 0)),  # x slab
                pl.BlockSpec((bt, 1), lambda i, j: (i, 0)),         # n_wins
                pl.BlockSpec((1, D), lambda i, j: (0, 0)),          # w1 (resident)
                pl.BlockSpec((1, 1), lambda i, j: (0, 0)),          # b1
                pl.BlockSpec((D, O), lambda i, j: (0, 0)),          # w2^T
                pl.BlockSpec((1, O), lambda i, j: (0, 0)),          # b2
            ],
            out_specs=pl.BlockSpec((bt, O), lambda i, j: (i, 0)),
            scratch_shapes=[
                pltpu.VMEM((bt, 1), jnp.float32),   # running max
                pltpu.VMEM((bt, 1), jnp.float32),   # running softmax denom
                pltpu.VMEM((bt, D), jnp.float32),   # running pooled sum
            ],
        ),
        compiler_params=pltpu.CompilerParams(
            dimension_semantics=("parallel", "arbitrary"),
            vmem_limit_bytes=params["vmem_limit"],
        ),
        cost_estimate=cost,
    )(x, nwins2d, w1_2d, b1_2d, w2_t, b2_2d)

    return out[:B]


def pool_att_ref(x, n_wins, w1, b1, w2, b2):
    """Plain-JAX reference mirroring the PyTorch PoolAtt.forward."""
    M = x.shape[1]
    hp = jax.lax.Precision.HIGHEST
    att = jnp.einsum("bmd,od->bmo", x, w1, precision=hp) + b1     # (B, M, 1)
    att = jnp.swapaxes(att, 1, 2)                                 # (B, 1, M)
    mask = jnp.arange(M)[None, :] < n_wins[:, None]               # (B, M)
    att = jnp.where(mask[:, None, :], att, -jnp.inf)
    att = jax.nn.softmax(att, axis=2)
    pooled = jnp.einsum("bnm,bmd->bnd", att, x, precision=hp)[:, 0]   # (B, D)
    return jnp.einsum("bd,od->bo", pooled, w2, precision=hp) + b2


if __name__ == "__main__":
    key = jax.random.PRNGKey(0)
    k_x, k_w1, k_b1, k_w2, k_b2, k_x2 = jax.random.split(key, 6)

    # ---- Test 1: small NISQA-like shapes (whole sequence resident). ----
    B, M, D, O = 2, 8, 32, 4   # batch, time windows, d_input, output_size
    x = jax.random.normal(k_x, (B, M, D), dtype=jnp.float32)
    n_wins = jnp.array([8, 5], dtype=jnp.int32)

    w1 = jax.random.normal(k_w1, (1, D), dtype=jnp.float32) / jnp.sqrt(D)
    b1 = jax.random.normal(k_b1, (1,), dtype=jnp.float32) * 0.1
    w2 = jax.random.normal(k_w2, (O, D), dtype=jnp.float32) / jnp.sqrt(D)
    b2 = jax.random.normal(k_b2, (O,), dtype=jnp.float32) * 0.1

    out = pool_att_forward(x, n_wins, w1, b1, w2, b2)
    jax.block_until_ready(out)
    ref = pool_att_ref(x, n_wins, w1, b1, w2, b2)
    assert out.shape == (B, O)
    assert jnp.allclose(out, ref, atol=2e-5, rtol=1e-5), float(
        jnp.max(jnp.abs(out - ref)))

    # ---- Test 2: force the batch-blocked + M-tiled (online softmax) path. ----
    B2, M2, D2 = 16, 40, 40
    x2 = jax.random.normal(k_x2, (B2, M2, D2), dtype=jnp.float32)
    n_wins2 = jnp.array([40, 35, 1, 17, 8, 40, 23, 5, 12, 31, 40, 2, 19, 27, 9, 36],
                        dtype=jnp.int32)
    w1b = jax.random.normal(k_w1, (1, D2), dtype=jnp.float32) / jnp.sqrt(D2)
    w2b = jax.random.normal(k_w2, (O, D2), dtype=jnp.float32) / jnp.sqrt(D2)

    out2 = pool_att_forward(x2, n_wins2, w1b, b1, w2b, b2, block_b=8, block_m=16)
    jax.block_until_ready(out2)
    ref2 = pool_att_ref(x2, n_wins2, w1b, b1, w2b, b2)
    assert out2.shape == (B2, O)
    assert jnp.allclose(out2, ref2, atol=1e-4, rtol=1e-4), float(
        jnp.max(jnp.abs(out2 - ref2)))

    print("KERNEL_OK")
</pallas_src>

<mosaic_0001>
module attributes {stable_mosaic.version = 11 : i64} {
  func.func @_pool_att_kernel(%arg0: i32, %arg1: i32, %arg2: memref<2x8x32xf32, #tpu.memory_space<vmem>>, %arg3: memref<2x1xi32, #tpu.memory_space<vmem>>, %arg4: memref<1x32xf32, #tpu.memory_space<vmem>>, %arg5: memref<1x1xf32, #tpu.memory_space<vmem>>, %arg6: memref<32x4xf32, #tpu.memory_space<vmem>>, %arg7: memref<1x4xf32, #tpu.memory_space<vmem>>, %arg8: memref<2x4xf32, #tpu.memory_space<vmem>>, %arg9: memref<2x1xf32, #tpu.memory_space<vmem>>, %arg10: memref<2x1xf32, #tpu.memory_space<vmem>>, %arg11: memref<2x32xf32, #tpu.memory_space<vmem>>) attributes {dimension_semantics = [#tpu.dimension_semantics<parallel>, #tpu.dimension_semantics<arbitrary>], iteration_bounds = array<i64: 1, 1>, scalar_prefetch = 0 : i64, scratch_operands = 3 : i64, tpu.core_type = #tpu.core_type<tc>, window_params = [{transform_indices = @transform_0, window_bounds = array<i64: 2, 8, 32>}, {transform_indices = @transform_1, window_bounds = array<i64: 2, 1>}, {pipeline_mode = #tpu.pipeline_mode<synchronous>, transform_indices = @transform_2, window_bounds = array<i64: 1, 32>}, {pipeline_mode = #tpu.pipeline_mode<synchronous>, transform_indices = @transform_3, window_bounds = array<i64: 1, 1>}, {pipeline_mode = #tpu.pipeline_mode<synchronous>, transform_indices = @transform_4, window_bounds = array<i64: 32, 4>}, {pipeline_mode = #tpu.pipeline_mode<synchronous>, transform_indices = @transform_5, window_bounds = array<i64: 1, 4>}, {transform_indices = @transform_6, window_bounds = array<i64: 2, 4>}]} {
    %c0_i32 = arith.constant 0 : i32
    %0 = arith.cmpi eq, %arg1, %c0_i32 : i32
    %1 = arith.extui %0 : i1 to i32
    %c0_i32_0 = arith.constant 0 : i32
    %2 = arith.cmpi ne, %1, %c0_i32_0 : i32
    scf.if %2 {
      %cst_27 = arith.constant 0xFF800000 : f32
      %53 = vector.broadcast %cst_27 : f32 to vector<2x1xf32>
      %c0_28 = arith.constant 0 : index
      %c0_29 = arith.constant 0 : index
      %54 = vector.load %arg9[%c0_28, %c0_29] : memref<2x1xf32, #tpu.memory_space<vmem>>, vector<2x1xf32>
      tpu.vector_store %arg9[%c0_28, %c0_29], %53 {strides = array<i32>} : memref<2x1xf32, #tpu.memory_space<vmem>>, vector<2x1xf32>,
      %cst_30 = arith.constant 0.000000e+00 : f32
      %55 = vector.broadcast %cst_30 : f32 to vector<2x1xf32>
      %c0_31 = arith.constant 0 : index
      %c0_32 = arith.constant 0 : index
      %56 = vector.load %arg10[%c0_31, %c0_32] : memref<2x1xf32, #tpu.memory_space<vmem>>, vector<2x1xf32>
      tpu.vector_store %arg10[%c0_31, %c0_32], %55 {strides = array<i32>} : memref<2x1xf32, #tpu.memory_space<vmem>>, vector<2x1xf32>,
      %cst_33 = arith.constant 0.000000e+00 : f32
      %57 = vector.broadcast %cst_33 : f32 to vector<2x32xf32>
      %c0_34 = arith.constant 0 : index
      %c0_35 = arith.constant 0 : index
      %58 = vector.load %arg11[%c0_34, %c0_35] : memref<2x32xf32, #tpu.memory_space<vmem>>, vector<2x32xf32>
      tpu.vector_store %arg11[%c0_34, %c0_35], %57 {strides = array<i32>} : memref<2x32xf32, #tpu.memory_space<vmem>>, vector<2x32xf32>,
    } else {
    }
    %c0 = arith.constant 0 : index
    %c0_1 = arith.constant 0 : index
    %c0_2 = arith.constant 0 : index
    %3 = vector.load %arg2[%c0, %c0_1, %c0_2] : memref<2x8x32xf32, #tpu.memory_space<vmem>>, vector<2x8x32xf32>
    %c0_3 = arith.constant 0 : index
    %c0_4 = arith.constant 0 : index
    %4 = vector.load %arg4[%c0_3, %c0_4] : memref<1x32xf32, #tpu.memory_space<vmem>>, vector<1x32xf32>
    %5 = vector.shape_cast %4 : vector<1x32xf32> to vector<1x1x32xf32>
    %6 = vector.broadcast %5 : vector<1x1x32xf32> to vector<2x8x32xf32>
    %7 = arith.mulf %3, %6 : vector<2x8x32xf32>
    %cst = arith.constant dense<0.000000e+00> : vector<2x8xf32>
    %8 = vector.multi_reduction <add>, %7, %cst [2] : vector<2x8x32xf32> to vector<2x8xf32>
    %9 = vector.shape_cast %8 : vector<2x8xf32> to vector<2x8x1xf32>
    %c0_5 = arith.constant 0 : index
    %c0_6 = arith.constant 0 : index
    %10 = vector.load %arg5[%c0_5, %c0_6] : memref<1x1xf32, #tpu.memory_space<vmem>>, vector<1x1xf32>
    %11 = vector.shape_cast %10 : vector<1x1xf32> to vector<1x1x1xf32>
    %12 = vector.broadcast %11 : vector<1x1x1xf32> to vector<2x8x1xf32>
    %13 = arith.addf %9, %12 : vector<2x8x1xf32>
    %14 = tpu.iota {dimensions = array<i32: 1>} : vector<2x8x1xi32>
    %c8_i32 = arith.constant 8 : i32
    %15 = arith.muli %arg1, %c8_i32 : i32
    %16 = vector.broadcast %15 : i32 to vector<2x8x1xi32>
    %17 = arith.addi %14, %16 : vector<2x8x1xi32>
    %c0_7 = arith.constant 0 : index
    %c0_8 = arith.constant 0 : index
    %18 = vector.load %arg3[%c0_7, %c0_8] : memref<2x1xi32, #tpu.memory_space<vmem>>, vector<2x1xi32>
    %19 = vector.shape_cast %18 : vector<2x1xi32> to vector<2x1x1xi32>
    %20 = vector.broadcast %19 : vector<2x1x1xi32> to vector<2x8x1xi32>
    %21 = arith.cmpi slt, %17, %20 : vector<2x8x1xi32>
    %cst_9 = arith.constant 0xFF800000 : f32
    %22 = vector.broadcast %cst_9 : f32 to vector<2x8x1xf32>
    %23 = arith.select %21, %13, %22 : vector<2x8x1xi1>, vector<2x8x1xf32>
    %c0_10 = arith.constant 0 : index
    %c0_11 = arith.constant 0 : index
    %24 = vector.load %arg9[%c0_10, %c0_11] : memref<2x1xf32, #tpu.memory_space<vmem>>, vector<2x1xf32>
    %25 = vector.shape_cast %24 : vector<2x1xf32> to vector<2x1x1xf32>
    %cst_12 = arith.constant dense<0xFF800000> : vector<2x1xf32>
    %26 = vector.multi_reduction <maximumf>, %23, %cst_12 [1] : vector<2x8x1xf32> to vector<2x1xf32>
    %27 = vector.shape_cast %26 : vector<2x1xf32> to vector<2x1x1xf32>
    %28 = arith.maximumf %25, %27 : vector<2x1x1xf32>
    %29 = arith.subf %25, %28 : vector<2x1x1xf32>
    %30 = math.exp %29 : vector<2x1x1xf32>
    %31 = vector.broadcast %28 : vector<2x1x1xf32> to vector<2x8x1xf32>
    %32 = arith.subf %23, %31 : vector<2x8x1xf32>
    %33 = math.exp %32 : vector<2x8x1xf32>
    %34 = vector.shape_cast %30 : vector<2x1x1xf32> to vector<2x1xf32>
    %c0_13 = arith.constant 0 : index
    %c0_14 = arith.constant 0 : index
    %35 = vector.load %arg10[%c0_13, %c0_14] : memref<2x1xf32, #tpu.memory_space<vmem>>, vector<2x1xf32>
    %36 = arith.mulf %34, %35 : vector<2x1xf32>
    %cst_15 = arith.constant dense<0.000000e+00> : vector<2x1xf32>
    %37 = vector.multi_reduction <add>, %33, %cst_15 [1] : vector<2x8x1xf32> to vector<2x1xf32>
    %38 = arith.addf %36, %37 : vector<2x1xf32>
    %c0_16 = arith.constant 0 : index
    %c0_17 = arith.constant 0 : index
    %39 = vector.load %arg10[%c0_16, %c0_17] : memref<2x1xf32, #tpu.memory_space<vmem>>, vector<2x1xf32>
    tpu.vector_store %arg10[%c0_16, %c0_17], %38 {strides = array<i32>} : memref<2x1xf32, #tpu.memory_space<vmem>>, vector<2x1xf32>,
    %40 = vector.broadcast %33 : vector<2x8x1xf32> to vector<2x8x32xf32>
    %41 = arith.mulf %40, %3 : vector<2x8x32xf32>
    %cst_18 = arith.constant dense<0.000000e+00> : vector<2x32xf32>
    %42 = vector.multi_reduction <add>, %41, %cst_18 [1] : vector<2x8x32xf32> to vector<2x32xf32>
    %c0_19 = arith.constant 0 : index
    %c0_20 = arith.constant 0 : index
    %43 = vector.load %arg11[%c0_19, %c0_20] : memref<2x32xf32, #tpu.memory_space<vmem>>, vector<2x32xf32>
    %44 = vector.broadcast %34 : vector<2x1xf32> to vector<2x32xf32>
    %45 = arith.mulf %44, %43 : vector<2x32xf32>
    %46 = arith.addf %45, %42 : vector<2x32xf32>
    %c0_21 = arith.constant 0 : index
    %c0_22 = arith.constant 0 : index
    %47 = vector.load %arg11[%c0_21, %c0_22] : memref<2x32xf32, #tpu.memory_space<vmem>>, vector<2x32xf32>
    tpu.vector_store %arg11[%c0_21, %c0_22], %46 {strides = array<i32>} : memref<2x32xf32, #tpu.memory_space<vmem>>, vector<2x32xf32>,
    %48 = vector.shape_cast %28 : vector<2x1x1xf32> to vector<2x1xf32>
    %c0_23 = arith.constant 0 : index
    %c0_24 = arith.constant 0 : index
    %49 = vector.load %arg9[%c0_23, %c0_24] : memref<2x1xf32, #tpu.memory_space<vmem>>, vector<2x1xf32>
    tpu.vector_store %arg9[%c0_23, %c0_24], %48 {strides = array<i32>} : memref<2x1xf32, #tpu.memory_space<vmem>>, vector<2x1xf32>,
    %c0_i32_25 = arith.constant 0 : i32
    %50 = arith.cmpi eq, %arg1, %c0_i32_25 : i32
    %51 = arith.extui %50 : i1 to i32
    %c0_i32_26 = arith.constant 0 : i32
    %52 = arith.cmpi ne, %51, %c0_i32_26 : i32
    scf.if %52 {
      %c0_27 = arith.constant 0 : index
      %c0_28 = arith.constant 0 : index
      %53 = vector.load %arg11[%c0_27, %c0_28] : memref<2x32xf32, #tpu.memory_space<vmem>>, vector<2x32xf32>
      %c0_29 = arith.constant 0 : index
      %c0_30 = arith.constant 0 : index
      %54 = vector.load %arg10[%c0_29, %c0_30] : memref<2x1xf32, #tpu.memory_space<vmem>>, vector<2x1xf32>
      %55 = vector.broadcast %54 : vector<2x1xf32> to vector<2x32xf32>
      %56 = arith.divf %53, %55 : vector<2x32xf32>
      %c0_31 = arith.constant 0 : index
      %c0_32 = arith.constant 0 : index
      %57 = vector.load %arg6[%c0_31, %c0_32] : memref<32x4xf32, #tpu.memory_space<vmem>>, vector<32x4xf32>
      %cst_33 = arith.constant dense<0.000000e+00> : vector<2x4xf32>
      %58 = tpu.matmul %56, %57, %cst_33 {dimension_numbers = #tpu.dot_dimension_numbers<[1], [0], [0], [1], [0, 0, 1, 1], [], []>} : vector<2x32xf32>, vector<32x4xf32>, vector<2x4xf32> -> vector<2x4xf32>
      %c0_34 = arith.constant 0 : index
      %c0_35 = arith.constant 0 : index
      %59 = vector.load %arg7[%c0_34, %c0_35] : memref<1x4xf32, #tpu.memory_space<vmem>>, vector<1x4xf32>
      %60 = vector.broadcast %59 : vector<1x4xf32> to vector<2x4xf32>
      %61 = arith.addf %58, %60 : vector<2x4xf32>
      %c0_36 = arith.constant 0 : index
      %c0_37 = arith.constant 0 : index
      %62 = vector.load %arg8[%c0_36, %c0_37] : memref<2x4xf32, #tpu.memory_space<vmem>>, vector<2x4xf32>
      tpu.vector_store %arg8[%c0_36, %c0_37], %61 {strides = array<i32>} : memref<2x4xf32, #tpu.memory_space<vmem>>, vector<2x4xf32>,
    } else {
    }
    return
  }
  func.func @transform_0(%arg0: i32, %arg1: i32) -> (i32, i32, i32) {
    %c0_i32 = arith.constant 0 : i32
    %c0_i32_0 = arith.constant 0 : i32
    return %arg0, %arg1, %c0_i32 : i32, i32, i32
  }
  func.func @transform_1(%arg0: i32, %arg1: i32) -> (i32, i32) {
    %c0_i32 = arith.constant 0 : i32
    %c0_i32_0 = arith.constant 0 : i32
    return %arg0, %c0_i32 : i32, i32
  }
  func.func @transform_2(%arg0: i32, %arg1: i32) -> (i32, i32) {
    %c0_i32 = arith.constant 0 : i32
    %c0_i32_0 = arith.constant 0 : i32
    %c0_i32_1 = arith.constant 0 : i32
    return %c0_i32, %c0_i32_0 : i32, i32
  }
  func.func @transform_3(%arg0: i32, %arg1: i32) -> (i32, i32) {
    %c0_i32 = arith.constant 0 : i32
    %c0_i32_0 = arith.constant 0 : i32
    %c0_i32_1 = arith.constant 0 : i32
    return %c0_i32, %c0_i32_0 : i32, i32
  }
  func.func @transform_4(%arg0: i32, %arg1: i32) -> (i32, i32) {
    %c0_i32 = arith.constant 0 : i32
    %c0_i32_0 = arith.constant 0 : i32
    %c0_i32_1 = arith.constant 0 : i32
    return %c0_i32, %c0_i32_0 : i32, i32
  }
  func.func @transform_5(%arg0: i32, %arg1: i32) -> (i32, i32) {
    %c0_i32 = arith.constant 0 : i32
    %c0_i32_0 = arith.constant 0 : i32
    %c0_i32_1 = arith.constant 0 : i32
    return %c0_i32, %c0_i32_0 : i32, i32
  }
  func.func @transform_6(%arg0: i32, %arg1: i32) -> (i32, i32) {
    %c0_i32 = arith.constant 0 : i32
    %c0_i32_0 = arith.constant 0 : i32
    return %arg0, %c0_i32 : i32, i32
  }
}

</mosaic_0001>

<llo_original>
// kernel: tpu_custom_call.1
$region0: #{tpu_custom_call.1}
  #allocation0 [shape = 'u32[]', space=smem, size = 0x4, offset = 0x4, fixed_abs, tag = 'smem constant byte address 0x4 - core index']
  #allocation1 [shape = 'u32[144,128]{1,0:T(1,128)}', space=vmem, size = 0x12000, scoped, tag = 'internal scratch']
  #allocation2 [shape = 'f32[2,1]{1,0:T(2,128)}', space=vmem, size = 0x400, scoped, tag = 'scratch operand']
  #allocation3 [shape = 'f32[2,1]{1,0:T(2,128)}', space=vmem, size = 0x400, scoped, tag = 'scratch operand']
  #allocation4 [shape = 'f32[2,32]{1,0:T(2,128)}', space=vmem, size = 0x400, scoped, tag = 'scratch operand']
  #allocation5 [shape = 'f32[1,1]{1,0:T(1,128)S(1)}', space=vmem, size = 0x200, scoped, tag = 'scoped memory for tpu_custom_call.1']
  %s0 = inlined_call_operand.vmem [shape: f32[2,8,32], index: 0, kind: input, shape index: {}]
  %s1 = inlined_call_operand.vmem [shape: s32[2,1], index: 1, kind: input, shape index: {}]
  %s2 = inlined_call_operand.vmem [shape: f32[1,32], index: 2, kind: input, shape index: {}]
  %s3 = inlined_call_operand.<no memory space> [shape: f32[1,1], index: 3, kind: input, shape index: {}]
  %s4 = inlined_call_operand.vmem [shape: f32[32,4], index: 4, kind: input, shape index: {}]
  %s5 = inlined_call_operand.vmem [shape: f32[1,4], index: 5, kind: input, shape index: {}]
  %s6 = inlined_call_operand.hbm [shape: f32[2,4], index: 6, kind: output, shape index: {}]
  %s7 = sld [smem:[#allocation0]]
  $region42: #{tpu_custom_call.1} parent=0
    _
  %s9 = ssub.s32 1, %s7
  %s10 = scalar_select 0, %s9, %s7
  %v11 = vstv %s3
  %12 = vst [vmem:[#allocation5] sm:$0x1] %v11
  $region1: #{tpu_custom_call.1} parent=0
    #allocation6 [shape = 'u8[1024]{0}', space=vmem, size = 0x400, scoped, tag = 'output window, operand 0, single buffered']
    #allocation7 [shape = 's32[1]{0}', space=sflag, size = 0x4, scoped, tag = 'scoped memory for tpu_custom_call.1']
    %13 = vsyncpa [#allocation7], 0
    // Predicated region
    $region2: #{tpu_custom_call.1} parent=1 // pred_check
      _
    $region3: #{tpu_custom_call.1} parent=1 // pred_check_branch
      %15 = sbr.rel (0) target = $region5
    $region4: #{tpu_custom_call.1} parent=1 // pred_region
      _
    $region5: #{tpu_custom_call.1} parent=1 // pred_fallthru
      _
    // Predicated region
    $region6: #{tpu_custom_call.1} parent=1 // pred_check
      _
    $region7: #{tpu_custom_call.1} parent=1 // pred_check_branch
      %17 = sbr.rel (0) target = $region9
    $region8: #{tpu_custom_call.1} parent=1 // pred_region
      _
    $region9: #{tpu_custom_call.1} parent=1 // pred_fallthru
      _
    // Predicated region
    $region10: #{tpu_custom_call.1} parent=1 // pred_check
      _
    $region11: #{tpu_custom_call.1} parent=1 // pred_check_branch
      %19 = sbr.rel (0) target = $region13
    $region12: #{tpu_custom_call.1} parent=1 // pred_region
      _
    $region13: #{tpu_custom_call.1} parent=1 // pred_fallthru
      _
    // Predicated region
    $region14: #{tpu_custom_call.1} parent=1 // pred_check
      _
    $region15: #{tpu_custom_call.1} parent=1 // pred_check_branch
      %21 = sbr.rel (0) target = $region17
    $region16: #{tpu_custom_call.1} parent=1 // pred_region
      _
    $region17: #{tpu_custom_call.1} parent=1 // pred_fallthru
      _
    // Predicated region
    $region18: #{tpu_custom_call.1} parent=1 // pred_check
      _
    $region19: #{tpu_custom_call.1} parent=1 // pred_check_branch
      %23 = sbr.rel (0) target = $region21
    $region20: #{tpu_custom_call.1} parent=1 // pred_region
      _
    $region21: #{tpu_custom_call.1} parent=1 // pred_fallthru
      _
    // Predicated region
    $region22: #{tpu_custom_call.1} parent=1 // pred_check
      _
    $region23: #{tpu_custom_call.1} parent=1 // pred_check_branch
      %25 = sbr.rel (0) target = $region25
    $region24: #{tpu_custom_call.1} parent=1 // pred_region
      _
    $region25: #{tpu_custom_call.1} parent=1 // pred_fallthru
      _
    %p26 = scmp.eq.s32.totalorder 0, 0
    // Predicated region
    $region26: #{tpu_custom_call.1} parent=1 // pred_check
      %p27 = pneg %p26
    $region27: #{tpu_custom_call.1} parent=1 // pred_check_branch
      %29 = sbr.rel (%p27) target = $region29
    $region28: #{tpu_custom_call.1} parent=1 // pred_region
      %vm30 = vcmask 1024
      %31 = vst.msk [vmem:[#allocation2] sm:$0x3] %vm30, -inf
      %32 = vst.msk [vmem:[#allocation3] sm:$0x3] %vm30, 0.0
      %vm33 = vcmask 254976
      %34 = vst.msk [vmem:[#allocation4] sm:$0x3] %vm33, 0.0
    $region29: #{tpu_custom_call.1} parent=1 // pred_fallthru
      _
    %v35 = vld [vmem:[%s0] sm:$0xff]
    %v36 = vld [vmem:[%s0 + $0x8] sm:$0xff]
    %v37 = vld [vmem:[%s2] sm:$0x1]
    %v39 = vlaneseq
    %v40 = vshrl.u32 %v39, 7
    %v41 = vsub.s32 0, %v40
    %v42 = vrot.slane %v37, %v41
    %v44 = vmul.f32 %v35, %v42
    %v45 = vmul.f32 %v36, %v42
    %vm46 = vcmask 261120
    %v47 = vsel %vm46, %v44, 0.0
    %48 = vadd.xlane.f32.xlu0 %v47
    %v49 = vpop.xlane.xlu0 %48
    %v50 = vsel %vm46, %v45, 0.0
    %51 = vadd.xlane.f32.xlu0 %v50
    %v52 = vpop.xlane.xlu0 %51
    %v53 = vld [vmem:[#allocation5] sm:$0x1]
    %v55 = vlaneseq
    %v56 = vshrl.u32 %v55, 7
    %v57 = vsub.s32 0, %v56
    %v58 = vrot.slane %v53, %v57
    %v60 = vadd.f32 %v49, %v58
    %v61 = vadd.f32 %v52, %v58
    %v62 = vlaneseq
    %v63 = vshrl.u32 %v62, 7
    %s64 = smul.u32 0, 8
    %v65 = vstv %s64
    %v66 = vadd.s32 %v63, %v65
    %v67 = vld [vmem:[%s1] sm:$0x3]
    %v69 = vunpack.c.l.s4 1966171168
    %v70 = vunpack.c.0.s8 %v69
    %v71 = vlaneseq
    %v72 = vshrl.u32 %v71, 7
    %v73 = vsub.s32 %v70, %v72
    %v74 = vrot.slane %v67, %v73
    %v75 = vcombine.high %v74, %v74
    %v77 = vunpack.c.l.s4 1966171168
    %v78 = vunpack.c.0.s8 %v77
    %v79 = vlaneseq
    %v80 = vshrl.u32 %v79, 7
    %v81 = vsub.s32 %v78, %v80
    %v82 = vrot.slane %v74, %v81
    %v84 = vunpack.c.l.s4 1966171168
    %v85 = vunpack.c.0.s8 %v84
    %v86 = vlaneseq
    %v87 = vshrl.u32 %v86, 7
    %v88 = vsub.s32 %v85, %v87
    %v89 = vrot.slane %v75, %v88
    %v90 = vlaneseq
    %v91 = vshrl.u32 %v90, 7
    %v92 = vsub.s32 0, %v91
    %v93 = vrot.slane %v82, %v92
    %v94 = vlaneseq
    %v95 = vshrl.u32 %v94, 7
    %v96 = vsub.s32 0, %v95
    %v97 = vrot.slane %v89, %v96
    %vm98 = vcmp.lt.s32.totalorder %v66, %v93
    %vm99 = vcmp.lt.s32.totalorder %v66, %v97
    %v100 = vsel %vm98, %v60, -inf
    %v101 = vsel %vm99, %v61, -inf
    %v102 = vld [vmem:[#allocation2] sm:$0x3]
    %v105 = vunpack.c.l.s4 1966171168
    %v106 = vunpack.c.0.s8 %v105
    %v107 = vlaneseq
    %v108 = vshrl.u32 %v107, 7
    %v109 = vsub.s32 %v106, %v108
    %v110 = vrot.slane %v102, %v109
    %v111 = vcombine.high %v110, %v110
    %v113 = vunpack.c.l.s4 1966171168
    %v114 = vunpack.c.0.s8 %v113
    %v115 = vlaneseq
    %v116 = vshrl.u32 %v115, 7
    %v117 = vsub.s32 %v114, %v116
    %v118 = vrot.slane %v110, %v117
    %v120 = vunpack.c.l.s4 1966171168
    %v121 = vunpack.c.0.s8 %v120
    %v122 = vlaneseq
    %v123 = vshrl.u32 %v122, 7
    %v124 = vsub.s32 %v121, %v123
    %v125 = vrot.slane %v111, %v124
    %vm128 = vcmask 7168
    %v129 = vsel %vm128, %v100, -inf
    %v130 = vrot.slane %v129, 4
    %v131 = vmax.f32 %v129, %v130
    %v132 = vrot.slane %v131, 2
    %v133 = vmax.f32 %v131, %v132
    %v134 = vrot.slane %v133, 1
    %v135 = vmax.f32 %v133, %v134
    %v136 = vsel %vm128, %v101, -inf
    %v137 = vrot.slane %v136, 4
    %v138 = vmax.f32 %v136, %v137
    %v139 = vrot.slane %v138, 2
    %v140 = vmax.f32 %v138, %v139
    %v141 = vrot.slane %v140, 1
    %v142 = vmax.f32 %v140, %v141
    %v143 = vmax.f32 %v118, %v135
    %v144 = vmax.f32 %v125, %v142
    %v145 = vsub.f32 %v118, %v143
    %v146 = vsub.f32 %v125, %v144
    %v147 = vmul.f32 %v145, 1.442695
    %v148 = vpow.pop %v147
    %v149 = vmul.f32 %v146, 1.442695
    %v150 = vpow.pop %v149
    %v153 = vlaneseq
    %v154 = vshrl.u32 %v153, 7
    %v155 = vsub.s32 0, %v154
    %v156 = vrot.slane %v143, %v155
    %v157 = vlaneseq
    %v158 = vshrl.u32 %v157, 7
    %v159 = vsub.s32 0, %v158
    %v160 = vrot.slane %v144, %v159
    %v163 = vsub.f32 %v100, %v156
    %v164 = vsub.f32 %v101, %v160
    %v165 = vmul.f32 %v163, 1.442695
    %v166 = vpow.pop %v165
    %v167 = vmul.f32 %v164, 1.442695
    %v168 = vpow.pop %v167
    %v169 = vld [vmem:[#allocation3] sm:$0x3]
    %v172 = vunpack.c.l.s4 1966171168
    %v173 = vunpack.c.0.s8 %v172
    %v174 = vlaneseq
    %v175 = vshrl.u32 %v174, 7
    %v176 = vsub.s32 %v173, %v175
    %v177 = vrot.slane %v169, %v176
    %v178 = vcombine.high %v177, %v177
    %v180 = vunpack.c.l.s4 1966171168
    %v181 = vunpack.c.0.s8 %v180
    %v182 = vlaneseq
    %v183 = vshrl.u32 %v182, 7
    %v184 = vsub.s32 %v181, %v183
    %v185 = vrot.slane %v177, %v184
    %v187 = vunpack.c.l.s4 1966171168
    %v188 = vunpack.c.0.s8 %v187
    %v189 = vlaneseq
    %v190 = vshrl.u32 %v189, 7
    %v191 = vsub.s32 %v188, %v190
    %v192 = vrot.slane %v178, %v191
    %v195 = vmul.f32 %v148, %v185
    %v196 = vmul.f32 %v150, %v192
    %v197 = vsel %vm128, %v166, 0.0
    %v198 = vrot.slane %v197, 4
    %v199 = vadd.f32 %v197, %v198
    %v200 = vrot.slane %v199, 2
    %v201 = vadd.f32 %v199, %v200
    %v202 = vrot.slane %v201, 1
    %v203 = vadd.f32 %v201, %v202
    %v204 = vsel %vm128, %v168, 0.0
    %v205 = vrot.slane %v204, 4
    %v206 = vadd.f32 %v204, %v205
    %v207 = vrot.slane %v206, 2
    %v208 = vadd.f32 %v206, %v207
    %v209 = vrot.slane %v208, 1
    %v210 = vadd.f32 %v208, %v209
    %v211 = vadd.f32 %v195, %v203
    %v212 = vadd.f32 %v196, %v210
    %v215 = vcombine.low %v211, %v212
    %v217 = vunpack.c.l.s4 1966171168
    %v218 = vunpack.c.0.s8 %v217
    %v219 = vlaneseq
    %v220 = vshrl.u32 %v219, 7
    %v221 = vsub.s32 %v218, %v220
    %v222 = vrot.slane %v215, %v221
    %v224 = vunpack.c.l.s4 1966171168
    %v225 = vunpack.c.0.s8 %v224
    %v226 = vlaneseq
    %v227 = vshrl.u32 %v226, 7
    %v228 = vsub.s32 %v225, %v227
    %v229 = vrot.slane %v222, %v228
    %vm231 = vcmask 1024
    %232 = vst.msk [vmem:[#allocation3] sm:$0x3] %vm231, %v229
    %234 = vset.pattern.permute.xlu0 0
    %235 = vperm.xlu0 %234, %v166
    %v236 = vpop.permute.xlu0 %235
    %239 = vset.pattern.permute.xlu0 0
    %240 = vperm.xlu0 %239, %v168
    %v241 = vpop.permute.xlu0 %240
    %v243 = vmul.f32 %v236, %v35
    %v244 = vmul.f32 %v241, %v36
    %v245 = vsel %vm46, %v243, 0.0
    %v246 = vrot.slane %v245, 4
    %v247 = vadd.f32 %v245, %v246
    %v248 = vrot.slane %v247, 2
    %v249 = vadd.f32 %v247, %v248
    %v250 = vrot.slane %v249, 1
    %v251 = vadd.f32 %v249, %v250
    %v252 = vsel %vm46, %v244, 0.0
    %v253 = vrot.slane %v252, 4
    %v254 = vadd.f32 %v252, %v253
    %v255 = vrot.slane %v254, 2
    %v256 = vadd.f32 %v254, %v255
    %v257 = vrot.slane %v256, 1
    %v258 = vadd.f32 %v256, %v257
    %v259 = vld [vmem:[#allocation4] sm:$0x3]
    %261 = vset.pattern.permute.xlu0 0
    %262 = vperm.xlu0 %261, %v148
    %v263 = vpop.permute.xlu0 %262
    %v265 = vlaneseq
    %v266 = vshrl.u32 %v265, 7
    %v267 = vsub.s32 0, %v266
    %v268 = vrot.slane %v263, %v267
    %270 = vset.pattern.permute.xlu0 0
    %271 = vperm.xlu0 %270, %v150
    %v272 = vpop.permute.xlu0 %271
    %v274 = vlaneseq
    %v275 = vshrl.u32 %v274, 7
    %v276 = vsub.s32 0, %v275
    %v277 = vrot.slane %v272, %v276
    %v280 = vunpack.c.l.s4 1966171168
    %v281 = vunpack.c.0.s8 %v280
    %v282 = vlaneseq
    %v283 = vshrl.u32 %v282, 7
    %v284 = vsub.s32 %v281, %v283
    %v285 = vrot.slane %v259, %v284
    %v286 = vcombine.high %v285, %v285
    %v288 = vunpack.c.l.s4 1966171168
    %v289 = vunpack.c.0.s8 %v288
    %v290 = vlaneseq
    %v291 = vshrl.u32 %v290, 7
    %v292 = vsub.s32 %v289, %v291
    %v293 = vrot.slane %v285, %v292
    %v295 = vunpack.c.l.s4 1966171168
    %v296 = vunpack.c.0.s8 %v295
    %v297 = vlaneseq
    %v298 = vshrl.u32 %v297, 7
    %v299 = vsub.s32 %v296, %v298
    %v300 = vrot.slane %v286, %v299
    %v303 = vmul.f32 %v268, %v293
    %v304 = vmul.f32 %v277, %v300
    %v308 = vunpack.c.l.s4 1966171168
    %v309 = vunpack.c.0.s8 %v308
    %v310 = vlaneseq
    %v311 = vshrl.u32 %v310, 7
    %v312 = vsub.s32 %v309, %v311
    %v313 = vrot.slane %v251, %v312
    %v315 = vunpack.c.l.s4 1966171168
    %v316 = vunpack.c.0.s8 %v315
    %v317 = vlaneseq
    %v318 = vshrl.u32 %v317, 7
    %v319 = vsub.s32 %v316, %v318
    %v320 = vrot.slane %v313, %v319
    %v322 = vunpack.c.l.s4 1966171168
    %v323 = vunpack.c.0.s8 %v322
    %v324 = vlaneseq
    %v325 = vshrl.u32 %v324, 7
    %v326 = vsub.s32 %v323, %v325
    %v327 = vrot.slane %v258, %v326
    %v329 = vunpack.c.l.s4 1966171168
    %v330 = vunpack.c.0.s8 %v329
    %v331 = vlaneseq
    %v332 = vshrl.u32 %v331, 7
    %v333 = vsub.s32 %v330, %v332
    %v334 = vrot.slane %v327, %v333
    %v337 = vadd.f32 %v303, %v320
    %v338 = vadd.f32 %v304, %v334
    %v341 = vcombine.low %v337, %v338
    %v343 = vunpack.c.l.s4 1966171168
    %v344 = vunpack.c.0.s8 %v343
    %v345 = vlaneseq
    %v346 = vshrl.u32 %v345, 7
    %v347 = vsub.s32 %v344, %v346
    %v348 = vrot.slane %v341, %v347
    %v350 = vunpack.c.l.s4 1966171168
    %v351 = vunpack.c.0.s8 %v350
    %v352 = vlaneseq
    %v353 = vshrl.u32 %v352, 7
    %v354 = vsub.s32 %v351, %v353
    %v355 = vrot.slane %v348, %v354
    %vm357 = vcmask 254976
    %358 = vst.msk [vmem:[#allocation4] sm:$0x3] %vm357, %v355
    %v359 = vcombine.low %v143, %v144
    %v361 = vunpack.c.l.s4 1966171168
    %v362 = vunpack.c.0.s8 %v361
    %v363 = vlaneseq
    %v364 = vshrl.u32 %v363, 7
    %v365 = vsub.s32 %v362, %v364
    %v366 = vrot.slane %v359, %v365
    %v368 = vunpack.c.l.s4 1966171168
    %v369 = vunpack.c.0.s8 %v368
    %v370 = vlaneseq
    %v371 = vshrl.u32 %v370, 7
    %v372 = vsub.s32 %v369, %v371
    %v373 = vrot.slane %v366, %v372
    %375 = vst.msk [vmem:[#allocation2] sm:$0x3] %vm231, %v373
    // Predicated region
    $region30: #{tpu_custom_call.1} parent=1 // pred_check
      %p376 = pneg %p26
    $region31: #{tpu_custom_call.1} parent=1 // pred_check_branch
      %378 = sbr.rel (%p376) target = $region33
    $region32: #{tpu_custom_call.1} parent=1 // pred_region
      %v379 = vld [vmem:[#allocation4] sm:$0x3]
      %v380 = vld [vmem:[#allocation3] sm:$0x3]
      %382 = vset.pattern.permute.xlu0 0
      %383 = vperm.xlu0 %382, %v380
      %v384 = vpop.permute.xlu0 %383
      %v386 = vrcp.pop %v384
      %v387 = vmul.f32 %v379, %v386
      %v388 = vld [vmem:[%s4] sm:$0xff]
      %v389 = vld [vmem:[%s4 + $0x8] sm:$0xff]
      %v390 = vld [vmem:[%s4 + $0x10] sm:$0xff]
      %v391 = vld [vmem:[%s4 + $0x18] sm:$0xff]
      %v392 = vld [vmem:[%s5] sm:$0x1]
      %v394 = vlaneseq
      %v395 = vshrl.u32 %v394, 7
      %v396 = vsub.s32 0, %v395
      %v397 = vrot.slane %v392, %v396
      %v400 = vsel %vm46, %v387, 0
      %402 = vmatprep.subr.mxu0 0.0
      %403 = vmatpush1.msra.mxu0 %v388
      %404 = vmatprep.subr.mxu0 0.0
      %405 = vmatpush1.msra.mxu0 %v389
      %406 = vmatprep.subr.mxu0 0.0
      %407 = vmatpush1.msra.mxu0 %v390
      %408 = vmatprep.subr.mxu0 0.0
      %409 = vmatpush1.msra.mxu0 %v391
      %410 = vmatprep.subr.mxu0 0.0
      %411 = vmatpush1.msra.mxu0 0.0
      %412 = vmatprep.subr.mxu0 0.0
      %413 = vmatpush1.msra.mxu0 0.0
      %414 = vmatprep.subr.mxu0 0.0
      %415 = vmatpush1.msra.mxu0 0.0
      %416 = vmatprep.subr.mxu0 0.0
      %417 = vmatpush1.msra.mxu0 0.0
      %418 = vmatprep.subr.mxu0 0.0
      %419 = vmatpush1.msra.mxu0 0.0
      %420 = vmatprep.subr.mxu0 0.0
      %421 = vmatpush1.msra.mxu0 0.0
      %422 = vmatprep.subr.mxu0 0.0
      %423 = vmatpush1.msra.mxu0 0.0
      %424 = vmatprep.subr.mxu0 0.0
      %425 = vmatpush1.msra.mxu0 0.0
      %426 = vmatprep.subr.mxu0 0.0
      %427 = vmatpush1.msra.mxu0 0.0
      %428 = vmatprep.subr.mxu0 0.0
      %429 = vmatpush1.msra.mxu0 0.0
      %430 = vmatprep.subr.mxu0 0.0
      %431 = vmatpush1.msra.mxu0 0.0
      %432 = vmatprep.subr.mxu0 0.0
      %433 = vmatpush1.msra.mxu0 0.0
      %434 = vmatprep.subr.mxu0 0.0
      %435 = vmatpush1.msra.mxu0 0.0
      %436 = vmatprep.subr.mxu0 0.0
      %437 = vmatpush1.msra.mxu0 0.0
      %438 = vmatprep.subr.mxu0 0.0
      %439 = vmatpush1.msra.mxu0 0.0
      %440 = vmatprep.subr.mxu0 0.0
      %441 = vmatpush1.msra.mxu0 0.0
      %442 = vmatprep.subr.mxu0 0.0
      %443 = vmatpush1.msra.mxu0 0.0
      %444 = vmatprep.subr.mxu0 0.0
      %445 = vmatpush1.msra.mxu0 0.0
      %446 = vmatprep.subr.mxu0 0.0
      %447 = vmatpush1.msra.mxu0 0.0
      %448 = vmatprep.subr.mxu0 0.0
      %449 = vmatpush1.msra.mxu0 0.0
      %450 = vmatprep.subr.mxu0 0.0
      %451 = vmatpush1.msra.mxu0 0.0
      %452 = vmatprep.subr.mxu0 0.0
      %453 = vmatpush1.msra.mxu0 0.0
      %454 = vmatprep.subr.mxu0 0.0
      %455 = vmatpush1.msra.mxu0 0.0
      %456 = vmatprep.subr.mxu0 0.0
      %457 = vmatpush1.msra.mxu0 0.0
      %458 = vmatprep.subr.mxu0 0.0
      %459 = vmatpush1.msra.mxu0 0.0
      %460 = vmatprep.subr.mxu0 0.0
      %461 = vmatpush1.msra.mxu0 0.0
      %462 = vmatprep.subr.mxu0 0.0
      %463 = vmatpush1.msra.mxu0 0.0
      %464 = vmatprep.subr.mxu0 0.0
      %465 = vmatpush1.msra.mxu0 0.0
      %466 = vmatprep.mubr.f32.mxu0 0.0
      %467 = vmatmul.mubr.f32.gmra.mrb[0].mxu0 %v400
      %v468 = vpop.f32.mrb[0].mxu0
      %v469 = vadd.f32 %v397, %v468
      %v470 = vpop.f32.mrb[0].mxu0
      %471 = vdwg.mxu0
      %vm472 = vcmask 25600
      %473 = vst.msk [vmem:[#allocation6] sm:$0x3] %vm472, %v469
    $region33: #{tpu_custom_call.1} parent=1 // pred_fallthru
      _
    // Predicated region
    $region34: #{tpu_custom_call.1} parent=1 // pred_check
      _
    $region35: #{tpu_custom_call.1} parent=1 // pred_check_branch
      %475 = sbr.rel (0) target = $region37
    $region36: #{tpu_custom_call.1} parent=1 // pred_region
      %s477 = ssub.s32 32, 32
      %478 = vsyncadd [#allocation7], %s477
      %s480 = sshll.u32 [#allocation6], 4
      %s481 = int_to_ptr.vmem [resolvable:$true] %s480
      %483 = dma.vmem_to_hbm [thread:$0]  %s481, 32, %s6, [#allocation7]
    $region37: #{tpu_custom_call.1} parent=1 // pred_fallthru
      _
    // Predicated region
    $region38: #{tpu_custom_call.1} parent=1 // pred_check
      _
    $region39: #{tpu_custom_call.1} parent=1 // pred_check_branch
      %485 = sbr.rel (0) target = $region41
    $region40: #{tpu_custom_call.1} parent=1 // pred_region
      %486 = dma.done [#allocation7], 32
    $region41: #{tpu_custom_call.1} parent=1 // pred_fallthru
      _
    %487 = vsyncpa [#allocation7], 1

</llo_original>
